<compile_context>
chip_gen: v5e
topology: v5e:2x2
jax: 0.10.0
libtpu: 0.0.40
codegen_flags: <defaults>
</compile_context>

<pallas_src>
import functools

import jax
import jax.numpy as jnp
from jax.experimental import pallas as pl
from jax.experimental.pallas import tpu as pltpu

EPS = 1e-5
NUM_MODULES = 2
N_EXPRESSION = 8
N_REG = 2
N_BLOCKS = 4


def _round_up(x, m):
    return ((x + m - 1) // m) * m


def _device_caps():
    """Per-generation MXU tile caps: v5e has 4x128x128 MXUs and a smaller
    default scoped VMEM, v6e/v7x have 2x256x256 MXUs."""
    try:
        kind = jax.devices()[0].device_kind.lower()
    except Exception:
        kind = ""
    if "v5" in kind:
        return 256, 128          # (tm cap, tn cap)
    return 512, 256


_TM_CAP, _TN_CAP = _device_caps()


# --------------------------------------------------------------------------
# Pallas kernel 1: single-shot MXU matmul (bf16 operands, f32 accumulate)
# with the per-output-channel bias fused into the epilogue.
# --------------------------------------------------------------------------
def _matmul_bias_kernel(a_ref, b_ref, bias_ref, o_ref):
    acc = jnp.dot(a_ref[...], b_ref[...], preferred_element_type=jnp.float32)
    o_ref[...] = (acc + bias_ref[...]).astype(o_ref.dtype)


@functools.lru_cache(maxsize=None)
def _matmul_call(Mp, K, Np, tm, tn):
    return pl.pallas_call(
        _matmul_bias_kernel,
        out_shape=jax.ShapeDtypeStruct((Mp, Np), jnp.float32),
        grid=(Mp // tm, Np // tn),
        in_specs=[pl.BlockSpec((tm, K), lambda i, j: (i, 0)),
                  pl.BlockSpec((K, tn), lambda i, j: (0, j)),
                  pl.BlockSpec((1, tn), lambda i, j: (0, j))],
        out_specs=pl.BlockSpec((tm, tn), lambda i, j: (i, j)),
        compiler_params=pltpu.CompilerParams(
            dimension_semantics=("parallel", "parallel")),
    )


def pallas_matmul(a, b, bias=None):
    """(M, K) @ (K, N) + bias -> (M, N) f32.  Operands go to the MXU in bf16,
    accumulation is f32; K is one full-dim block (no K padding copy)."""
    M, K = a.shape
    K2, N = b.shape
    assert K == K2
    Np = _round_up(N, 128)
    tn = min(_TN_CAP, Np)
    tm = min(_TM_CAP, _round_up(M, 16))
    Mp = _round_up(M, tm)

    a = a.astype(jnp.bfloat16)
    if Mp != M:
        a = jnp.pad(a, ((0, Mp - M), (0, 0)))
    b = b.astype(jnp.bfloat16)
    if Np != N:
        b = jnp.pad(b, ((0, 0), (0, Np - N)))
    if bias is None:
        bias2 = jnp.zeros((1, Np), jnp.float32)
    else:
        bias2 = jnp.pad(bias.astype(jnp.float32), (0, Np - N)).reshape(1, Np)

    out = _matmul_call(Mp, K, Np, tm, tn)(a, b, bias2)
    if Mp != M or Np != N:
        out = out[:M, :N]        # fuses with the consumer reshape under jit
    return out


# --------------------------------------------------------------------------
# Pallas kernel 2: fused InstanceNorm2d (affine=False, eps=1e-5) + ReLU on
# NHWC activations.  One (H*W, C) slab per batch sample; single-pass stats.
# --------------------------------------------------------------------------
def _inorm_relu_kernel(x_ref, o_ref):
    x = x_ref[...]
    mean = jnp.mean(x, axis=1, keepdims=True)
    msq = jnp.mean(x * x, axis=1, keepdims=True)       # single-pass E[x^2]
    var = jnp.maximum(msq - mean * mean, 0.0)          # biased var (PyTorch IN)
    y = (x - mean) * jax.lax.rsqrt(var + EPS)
    o_ref[...] = jnp.maximum(y, 0.0)


@functools.lru_cache(maxsize=None)
def _inorm_call(n, hw, c):
    return pl.pallas_call(
        _inorm_relu_kernel,
        out_shape=jax.ShapeDtypeStruct((n, hw, c), jnp.float32),
        grid=(n,),
        in_specs=[pl.BlockSpec((1, hw, c), lambda i: (i, 0, 0))],
        out_specs=pl.BlockSpec((1, hw, c), lambda i: (i, 0, 0)),
        compiler_params=pltpu.CompilerParams(
            dimension_semantics=("parallel",),
            vmem_limit_bytes=32 * 1024 * 1024),
    )


@jax.jit
def instance_norm_relu(x):
    """x: (N, H, W, C) f32 -> InstanceNorm2d(x) then ReLU (NHWC)."""
    n, h, w, c = x.shape
    out = _inorm_call(n, h * w, c)(x.reshape(n, h * w, c))
    return out.reshape(n, h, w, c)


# --------------------------------------------------------------------------
# Convolution: NHWC im2col (slices + lane-axis concat, no transposes) fused
# with the bf16 cast, then the Pallas matmul with fused bias.
# --------------------------------------------------------------------------
@functools.partial(jax.jit, static_argnames=("stride", "padding"))
def _conv2d_jit(x, w, b, *, stride, padding):
    """x: (N, H, W, Cin) NHWC; w: (Cout, Cin, KH, KW) in PyTorch layout."""
    N, H, W, C = x.shape
    Cout, Cin, KH, KW = w.shape
    Ho = (H + 2 * padding - KH) // stride + 1
    Wo = (W + 2 * padding - KW) // stride + 1
    xb = x.astype(jnp.bfloat16)
    if KH == 1 and KW == 1 and padding == 0 and stride == 1:
        cols = xb.reshape(N * H * W, C)
        wmat = w.reshape(Cout, Cin).T
    else:
        xp = jnp.pad(xb, ((0, 0), (padding, padding), (padding, padding), (0, 0)))
        patches = [xp[:, i:i + stride * Ho:stride, j:j + stride * Wo:stride, :]
                   for i in range(KH) for j in range(KW)]
        cols = jnp.concatenate(patches, axis=-1).reshape(N * Ho * Wo, KH * KW * C)
        wmat = w.transpose(2, 3, 1, 0).reshape(KH * KW * Cin, Cout)
    out = pallas_matmul(cols, wmat, b)                 # (M, Cout) f32
    return out.reshape(N, Ho, Wo, Cout)


@functools.lru_cache(maxsize=None)
def _zero_bias(cout):
    return jnp.zeros((cout,), jnp.float32)


def conv2d(x, w, b=None, stride=1, padding=0):
    if b is None:
        b = _zero_bias(int(w.shape[0]))
    return _conv2d_jit(x, w, b, stride=stride, padding=padding)


def max_pool2(x):                       # F.max_pool2d(x, 2, 2) on NHWC
    n, h, w, c = x.shape
    return x.reshape(n, h // 2, 2, w // 2, 2, c).max(axis=(2, 4))


def upsample2(x):                       # F.interpolate(scale_factor=2, 'nearest')
    return jnp.repeat(jnp.repeat(x, 2, axis=1), 2, axis=2)


# --------------------------------------------------------------------------
# ConvBlock / HourGlass / EmoNet forward (structure mirrors the nn.Module).
# --------------------------------------------------------------------------
def conv_block(p, x):
    # bn1+relu is shared with the downsample branch (both are the same
    # parameter-free InstanceNorm2d + ReLU on x).
    t = instance_norm_relu(x)
    out1 = conv2d(t, p['conv1'], stride=1, padding=1)
    out2 = conv2d(instance_norm_relu(out1), p['conv2'], stride=1, padding=1)
    out3 = conv2d(instance_norm_relu(out2), p['conv3'], stride=1, padding=1)
    out = jnp.concatenate([out1, out2, out3], axis=-1)
    if 'downsample' in p:
        residual = conv2d(t, p['downsample'])          # IN + ReLU + 1x1 conv
    else:
        residual = x
    return out + residual


def hourglass_forward(p, level, inp):
    up1 = conv_block(p['b1_%d' % level], inp)
    low1 = max_pool2(inp)
    low1 = conv_block(p['b2_%d' % level], low1)
    if level > 1:
        low2 = hourglass_forward(p, level - 1, low1)
    else:
        low2 = conv_block(p['b2_plus_%d' % level], low1)
    low3 = conv_block(p['b3_%d' % level], low2)
    up2 = upsample2(low3)
    return up1 + up2


def emo_fc(p, x):
    # Batch is tiny (M=2): plain jnp.dot, no point padding M to an MXU tile.
    x = jnp.dot(x, p['fc1_w'].T) + p['fc1_b']
    # BatchNorm1d in training mode (fresh module default): batch statistics.
    # TODO(synk): running-stat update of BatchNorm1d is stateful; not modeled.
    mean = jnp.mean(x, axis=0, keepdims=True)
    var = jnp.mean((x - mean) ** 2, axis=0, keepdims=True)
    x = (x - mean) * jax.lax.rsqrt(var + EPS)
    x = x * p['bn_g'] + p['bn_b']
    x = jnp.maximum(x, 0.0)
    x = jnp.dot(x, p['fc2_w'].T) + p['fc2_b']
    return x


def emonet_forward(params, x_nchw):
    x = jnp.transpose(x_nchw, (0, 2, 3, 1))                  # NCHW -> NHWC once
    x = conv2d(x, params['conv1_w'], params['conv1_b'], stride=2, padding=3)
    x = instance_norm_relu(x)                                # bn1 + relu
    x = max_pool2(conv_block(params['conv2'], x))
    x = conv_block(params['conv3'], x)
    x = conv_block(params['conv4'], x)

    previous = x
    hg_features = []
    tmp_out = None
    for i in range(NUM_MODULES):
        hg = hourglass_forward(params['m'][i], 4, previous)
        ll = conv_block(params['top_m'][i], hg)
        ll = instance_norm_relu(
            conv2d(ll, params['conv_last_w'][i], params['conv_last_b'][i]))
        tmp_out = conv2d(ll, params['l_w'][i], params['l_b'][i])
        if i < NUM_MODULES - 1:
            ll = conv2d(ll, params['bl_w'][i], params['bl_b'][i])       # ll reassigned
            tmp_out_ = conv2d(tmp_out, params['al_w'][i], params['al_b'][i])
            previous = previous + ll + tmp_out_
        hg_features.append(ll)          # matches PyTorch: post-'bl' ll for i < last

    hg_cat = jnp.concatenate(hg_features, axis=-1)           # (N, H, W, 512)
    # attention=True branch
    mask = jnp.sum(tmp_out, axis=-1, keepdims=True)
    hg_cat = hg_cat * mask
    emo_feat = jnp.concatenate([x, hg_cat], axis=-1)         # (N, H, W, 768)

    emo = conv2d(emo_feat, params['emo_in_w'], params['emo_in_b'])
    for i in range(N_BLOCKS):
        emo = max_pool2(conv_block(params['emo_net'][i], emo))   # 64->32->16->8->4
    feat = jnp.mean(emo, axis=(1, 2))                        # AvgPool2d(4) on 4x4

    final = emo_fc(params, feat)                             # (N, 10)
    # TODO(synk): temporal_smoothing (disabled by default) keeps a CUDA state buffer; skipped.
    return {
        'heatmap': jnp.transpose(tmp_out, (0, 3, 1, 2)),     # NHWC -> NCHW output
        'expression': final[:, :-2],
        'valence': final[:, -2],
        'arousal': final[:, -1],
    }


# --------------------------------------------------------------------------
# Deterministic parameter construction (shapes per EmoNet.__init__).
# --------------------------------------------------------------------------
def make_params():
    base = jax.random.PRNGKey(0)
    ctr = [0]

    def nxt():
        ctr[0] += 1
        return jax.random.fold_in(base, ctr[0])

    def conv_w(cout, cin, kh, kw):
        fan_in = cin * kh * kw
        return jax.random.normal(nxt(), (cout, cin, kh, kw),
                                 jnp.float32) * (2.0 / fan_in) ** 0.5

    def bias(cout):
        return 0.01 * jax.random.normal(nxt(), (cout,), jnp.float32)

    def cb(cin, cout):
        p = {'conv1': conv_w(cout // 2, cin, 3, 3),
             'conv2': conv_w(cout // 4, cout // 2, 3, 3),
             'conv3': conv_w(cout // 4, cout // 4, 3, 3)}
        if cin != cout:
            p['downsample'] = conv_w(cout, cin, 1, 1)
        return p

    def hourglass(depth=4):
        p = {}
        for level in range(depth, 0, -1):
            p['b1_%d' % level] = cb(256, 256)
            p['b2_%d' % level] = cb(256, 256)
            if level == 1:
                p['b2_plus_%d' % level] = cb(256, 256)
            p['b3_%d' % level] = cb(256, 256)
        return p

    params = {
        'conv1_w': conv_w(64, 3, 7, 7), 'conv1_b': bias(64),
        'conv2': cb(64, 128), 'conv3': cb(128, 128), 'conv4': cb(128, 256),
        'm': [hourglass(4) for _ in range(NUM_MODULES)],
        'top_m': [cb(256, 256) for _ in range(NUM_MODULES)],
        'conv_last_w': [conv_w(256, 256, 1, 1) for _ in range(NUM_MODULES)],
        'conv_last_b': [bias(256) for _ in range(NUM_MODULES)],
        'l_w': [conv_w(68, 256, 1, 1) for _ in range(NUM_MODULES)],
        'l_b': [bias(68) for _ in range(NUM_MODULES)],
        'bl_w': [conv_w(256, 256, 1, 1) for _ in range(NUM_MODULES - 1)],
        'bl_b': [bias(256) for _ in range(NUM_MODULES - 1)],
        'al_w': [conv_w(256, 68, 1, 1) for _ in range(NUM_MODULES - 1)],
        'al_b': [bias(256) for _ in range(NUM_MODULES - 1)],
        # attention=True -> n_in_features = 256 * (num_modules + 1) = 768
        'emo_in_w': conv_w(256, 256 * (NUM_MODULES + 1), 1, 1),
        'emo_in_b': bias(256),
        'emo_net': [cb(256, 256) for _ in range(N_BLOCKS)],
        'fc1_w': jax.random.normal(nxt(), (128, 256), jnp.float32) * (2.0 / 256) ** 0.5,
        'fc1_b': bias(128),
        'bn_g': jnp.ones((128,), jnp.float32),
        'bn_b': jnp.zeros((128,), jnp.float32),
        'fc2_w': jax.random.normal(nxt(), (N_EXPRESSION + N_REG, 128),
                                   jnp.float32) * (2.0 / 128) ** 0.5,
        'fc2_b': bias(N_EXPRESSION + N_REG),
    }
    return params


if __name__ == "__main__":
    # 256x256 is the smallest spatial size the architecture admits:
    # 4 hourglass levels + 4 emo-net max-pools + AvgPool2d(4) + view(B, 256).
    key = jax.random.PRNGKey(0)
    x = jax.random.normal(key, (2, 3, 256, 256), jnp.float32)

    params = make_params()
    out = emonet_forward(params, x)
    out = jax.block_until_ready(out)

    assert out['heatmap'].shape == (2, 68, 64, 64)
    assert out['expression'].shape == (2, N_EXPRESSION)
    assert out['valence'].shape == (2,)
    assert out['arousal'].shape == (2,)
    print("KERNEL_OK")
</pallas_src>

<mosaic_0001>
module attributes {stable_mosaic.version = 11 : i64} {
  func.func @_matmul_bias_kernel(%arg0: i32, %arg1: i32, %arg2: memref<512x147xbf16, #tpu.memory_space<vmem>>, %arg3: memref<147x128xbf16, #tpu.memory_space<vmem>>, %arg4: memref<1x128xf32, #tpu.memory_space<vmem>>, %arg5: memref<512x128xf32, #tpu.memory_space<vmem>>) attributes {dimension_semantics = [#tpu.dimension_semantics<parallel>, #tpu.dimension_semantics<parallel>], iteration_bounds = array<i64: 64, 1>, scalar_prefetch = 0 : i64, scratch_operands = 0 : i64, tpu.core_type = #tpu.core_type<tc>, window_params = [{transform_indices = @transform_0, window_bounds = array<i64: 512, 147>}, {transform_indices = @transform_1, window_bounds = array<i64: 147, 128>}, {transform_indices = @transform_2, window_bounds = array<i64: 1, 128>}, {transform_indices = @transform_3, window_bounds = array<i64: 512, 128>}]} {
    %c0 = arith.constant 0 : index
    %c0_0 = arith.constant 0 : index
    %0 = vector.load %arg2[%c0, %c0_0] : memref<512x147xbf16, #tpu.memory_space<vmem>>, vector<512x147xbf16>
    %c0_1 = arith.constant 0 : index
    %c0_2 = arith.constant 0 : index
    %1 = vector.load %arg3[%c0_1, %c0_2] : memref<147x128xbf16, #tpu.memory_space<vmem>>, vector<147x128xbf16>
    %cst = arith.constant dense<0.000000e+00> : vector<512x128xf32>
    %2 = tpu.matmul %0, %1, %cst {dimension_numbers = #tpu.dot_dimension_numbers<[1], [0], [0], [1], [0, 0, 1, 1], [], []>} : vector<512x147xbf16>, vector<147x128xbf16>, vector<512x128xf32> -> vector<512x128xf32>
    %c0_3 = arith.constant 0 : index
    %c0_4 = arith.constant 0 : index
    %3 = vector.load %arg4[%c0_3, %c0_4] : memref<1x128xf32, #tpu.memory_space<vmem>>, vector<1x128xf32>
    %4 = vector.broadcast %3 : vector<1x128xf32> to vector<512x128xf32>
    %5 = arith.addf %2, %4 : vector<512x128xf32>
    %c0_5 = arith.constant 0 : index
    %c0_6 = arith.constant 0 : index
    %6 = vector.load %arg5[%c0_5, %c0_6] : memref<512x128xf32, #tpu.memory_space<vmem>>, vector<512x128xf32>
    tpu.vector_store %arg5[%c0_5, %c0_6], %5 {strides = array<i32>} : memref<512x128xf32, #tpu.memory_space<vmem>>, vector<512x128xf32>,
    return
  }
  func.func @transform_0(%arg0: i32, %arg1: i32) -> (i32, i32) {
    %c0_i32 = arith.constant 0 : i32
    %c0_i32_0 = arith.constant 0 : i32
    return %arg0, %c0_i32 : i32, i32
  }
  func.func @transform_1(%arg0: i32, %arg1: i32) -> (i32, i32) {
    %c0_i32 = arith.constant 0 : i32
    %c0_i32_0 = arith.constant 0 : i32
    return %c0_i32, %arg1 : i32, i32
  }
  func.func @transform_2(%arg0: i32, %arg1: i32) -> (i32, i32) {
    %c0_i32 = arith.constant 0 : i32
    %c0_i32_0 = arith.constant 0 : i32
    return %c0_i32, %arg1 : i32, i32
  }
  func.func @transform_3(%arg0: i32, %arg1: i32) -> (i32, i32) {
    %c0_i32 = arith.constant 0 : i32
    return %arg0, %arg1 : i32, i32
  }
}

</mosaic_0001>

<llo_original>
// kernel: _conv2d_jit.1
$region0: #{_conv2d_jit.1}
  #allocation0 [shape = 'u32[]', space=smem, size = 0x4, offset = 0x4, fixed_abs, tag = 'smem constant byte address 0x4 - core index']
  #allocation1 [shape = 'u32[72,128]{1,0:T(1,128)}', space=vmem, size = 0x9000, scoped, tag = 'internal scratch']
  %s0 = inlined_call_operand.vmem [shape: bf16[32768,147], index: 0, kind: input, shape index: {}]
  %s1 = inlined_call_operand.vmem [shape: bf16[147,128], index: 1, kind: input, shape index: {}]
  %s2 = inlined_call_operand.vmem [shape: f32[1,128], index: 2, kind: input, shape index: {}]
  %s3 = inlined_call_operand.vmem [shape: f32[32768,128], index: 3, kind: output, shape index: {}]
  %s4 = sld [smem:[#allocation0]]
  $region45: #{_conv2d_jit.1} parent=0
    _
  %s6 = ssub.s32 1, %s4
  %s7 = scalar_select 0, %s6, %s4
  loop: start=0, step=1, limit=66
  $region2: #{_conv2d_jit.1} parent=0 // loop_pre_header
    _
  $region3: #{_conv2d_jit.1} parent=0 // loop_header
    %s9 = sphi 0, %s13
    %p10 = scmp.ge.s32.totalorder %s9, 66
    %s16 = sphi 0, %s28
    %s17 = sphi 0, %s24
    %s18 = sphi 0, %s16
    %s19 = sphi 0, %s17
    %s20 = sphi 0, %s18
    %s21 = sphi 0, %s19
    %s31 = sphi 0, %s33
    %s34 = sphi 0, %s31
    %s35 = sphi 0, %s34
    %s51 = sphi 0, %s35
    %s57 = sphi 0, %s59
    %s60 = sphi 0, %s57
    %s61 = sphi 0, %s60
    %s77 = sphi 0, %s61
    %s83 = sphi 0, %s85
    %s86 = sphi 0, %s83
    %s87 = sphi 0, %s86
    %s103 = sphi 0, %s87
    %s111 = sphi 0, %s113
    %s114 = sphi 0, %s111
    %s115 = sphi 0, %s114
    %s131 = sphi 0, %s115
  $region4: #{_conv2d_jit.1} parent=0 // loop_header_branch
    %12 = sbr.rel (%p10) target = $region8
  $region5: #{_conv2d_jit.1} parent=0 // loop_body
    %s14 = ssub.s32 %s9, 1
    %s15 = ssub.s32 %s9, 2
    %s22 = sadd.s32 1, %s17
    %p23 = scmp.ge.s32.totalorder %s22, 1
    %s24 = scalar_select %p23, 0, %s22
    %s25 = sadd.s32 1, %s16
    %s26 = scalar_select %p23, %s25, %s16
    %p27 = scmp.ge.s32.totalorder %s26, 64
    %s28 = scalar_select %p27, 0, %s26
    %s29 = ssub.s32 %s16, %s28
    %p30 = scmp.eq.s32.totalorder %s29, 0
    %s32 = sadd.s32 %s31, 1
    %s33 = scalar_select %p30, %s31, %s32
    %p36 = pneg %p30
    %p37 = scmp.eq.s32.totalorder %s9, 63
    %p38 = por %p36, %p37
    %p39 = scmp.ne.s32.totalorder %s31, %s34
    %p40 = scmp.eq.s32.totalorder %s9, 0
    %p41 = por %p39, %p40
    %p42 = scmp.ne.s32.totalorder %s31, %s34
    %p43 = scmp.eq.s32.totalorder %s14, 63
    %p44 = por %p42, %p43
    %p45 = scmp.ne.s32.totalorder %s34, %s35
    %p46 = scmp.eq.s32.totalorder %s14, 0
    %p47 = por %p45, %p46
    %p48 = scmp.ne.s32.totalorder %s34, %s35
    %p49 = scmp.eq.s32.totalorder %s15, 63
    %p50 = por %p48, %p49
    %p52 = scmp.ne.s32.totalorder %s35, %s51
    %p53 = scmp.eq.s32.totalorder %s15, 0
    %p54 = por %p52, %p53
    %s55 = ssub.s32 %s17, %s24
    %p56 = scmp.eq.s32.totalorder %s55, 0
    %s58 = sadd.s32 %s57, 1
    %s59 = scalar_select %p56, %s57, %s58
    %p62 = pneg %p56
    %p63 = scmp.eq.s32.totalorder %s9, 63
    %p64 = por %p62, %p63
    %p65 = scmp.ne.s32.totalorder %s57, %s60
    %p66 = scmp.eq.s32.totalorder %s9, 0
    %p67 = por %p65, %p66
    %p68 = scmp.ne.s32.totalorder %s57, %s60
    %p69 = scmp.eq.s32.totalorder %s14, 63
    %p70 = por %p68, %p69
    %p71 = scmp.ne.s32.totalorder %s60, %s61
    %p72 = scmp.eq.s32.totalorder %s14, 0
    %p73 = por %p71, %p72
    %p74 = scmp.ne.s32.totalorder %s60, %s61
    %p75 = scmp.eq.s32.totalorder %s15, 63
    %p76 = por %p74, %p75
    %p78 = scmp.ne.s32.totalorder %s61, %s77
    %p79 = scmp.eq.s32.totalorder %s15, 0
    %p80 = por %p78, %p79
    %s81 = ssub.s32 %s17, %s24
    %p82 = scmp.eq.s32.totalorder %s81, 0
    %s84 = sadd.s32 %s83, 1
    %s85 = scalar_select %p82, %s83, %s84
    %p88 = pneg %p82
    %p89 = scmp.eq.s32.totalorder %s9, 63
    %p90 = por %p88, %p89
    %p91 = scmp.ne.s32.totalorder %s83, %s86
    %p92 = scmp.eq.s32.totalorder %s9, 0
    %p93 = por %p91, %p92
    %p94 = scmp.ne.s32.totalorder %s83, %s86
    %p95 = scmp.eq.s32.totalorder %s14, 63
    %p96 = por %p94, %p95
    %p97 = scmp.ne.s32.totalorder %s86, %s87
    %p98 = scmp.eq.s32.totalorder %s14, 0
    %p99 = por %p97, %p98
    %p100 = scmp.ne.s32.totalorder %s86, %s87
    %p101 = scmp.eq.s32.totalorder %s15, 63
    %p102 = por %p100, %p101
    %p104 = scmp.ne.s32.totalorder %s87, %s103
    %p105 = scmp.eq.s32.totalorder %s15, 0
    %p106 = por %p104, %p105
    %s107 = ssub.s32 %s16, %s28
    %s108 = ssub.s32 %s17, %s24
    %s109 = sor.u32 %s107, %s108
    %p110 = scmp.eq.s32.totalorder %s109, 0
    %s112 = sadd.s32 %s111, 1
    %s113 = scalar_select %p110, %s111, %s112
    %p116 = pneg %p110
    %p117 = scmp.eq.s32.totalorder %s9, 63
    %p118 = por %p116, %p117
    %p119 = scmp.ne.s32.totalorder %s111, %s114
    %p120 = scmp.eq.s32.totalorder %s9, 0
    %p121 = por %p119, %p120
    %p122 = scmp.ne.s32.totalorder %s111, %s114
    %p123 = scmp.eq.s32.totalorder %s14, 63
    %p124 = por %p122, %p123
    %p125 = scmp.ne.s32.totalorder %s114, %s115
    %p126 = scmp.eq.s32.totalorder %s14, 0
    %p127 = por %p125, %p126
    %p128 = scmp.ne.s32.totalorder %s114, %s115
    %p129 = scmp.eq.s32.totalorder %s15, 63
    %p130 = por %p128, %p129
    %p132 = scmp.ne.s32.totalorder %s115, %s131
    %p133 = scmp.eq.s32.totalorder %s15, 0
    %p134 = por %p132, %p133
    %p135 = scmp.le.s32.totalorder 1, %s9
    %p136 = scmp.lt.s32.totalorder %s9, 65
    %p137 = pnand %p135, %p136
    %p138 = pneg %p137
    // Predicated region
    $region9: #{_conv2d_jit.1} parent=5 // pred_check
      _
    $region10: #{_conv2d_jit.1} parent=5 // pred_check_branch
      %140 = sbr.rel (%p137) target = $region12
    $region11: #{_conv2d_jit.1} parent=5 // pred_region
      %s141 = ssub.s32 %s9, 1
      // Predicated region
      $region13: #{_conv2d_jit.1} parent=11 // pred_check
        %p142 = pneg %p73
      $region14: #{_conv2d_jit.1} parent=11 // pred_check_branch
        %144 = sbr.rel (%p142) target = $region16
      $region15: #{_conv2d_jit.1} parent=11 // pred_region
        %p145 = scmp.lt.s32.totalorder %s19, 0
        %s146 = scalar_select %p145, %s19, 0
        %s147 = smul.addr %s146, 4
        %s148 = scalar_lea.vmem %s1, %s147
      $region16: #{_conv2d_jit.1} parent=11 // pred_fallthru
        _
      // Predicated region
      $region17: #{_conv2d_jit.1} parent=11 // pred_check
        %p149 = pneg %p99
      $region18: #{_conv2d_jit.1} parent=11 // pred_check_branch
        %151 = sbr.rel (%p149) target = $region20
      $region19: #{_conv2d_jit.1} parent=11 // pred_region
        %p152 = scmp.lt.s32.totalorder %s19, 0
        %s153 = scalar_select %p152, %s19, 0
        %s154 = scalar_lea.vmem %s2, %s153
      $region20: #{_conv2d_jit.1} parent=11 // pred_fallthru
        _
    $region12: #{_conv2d_jit.1} parent=5 // pred_fallthru
      _
    %p155 = scmp.lt.s32.totalorder %s9, 64
    // Predicated region
    $region21: #{_conv2d_jit.1} parent=5 // pred_check
      %p156 = pneg %p155
    $region22: #{_conv2d_jit.1} parent=5 // pred_check_branch
      %158 = sbr.rel (%p156) target = $region24
    $region23: #{_conv2d_jit.1} parent=5 // pred_region
      // Predicated region
      $region25: #{_conv2d_jit.1} parent=23 // pred_check
        %p159 = pneg %p41
      $region26: #{_conv2d_jit.1} parent=23 // pred_check_branch
        %161 = sbr.rel (%p159) target = $region28
      $region27: #{_conv2d_jit.1} parent=23 // pred_region
        %s162 = smul.u32 64, %s16
        %p163 = scmp.lt.s32.totalorder %s162, 4095
        %s164 = scalar_select %p163, %s162, 4095
        %s165 = smul.addr %s164, 2
        %s166 = smul.addr %s165, 4
        %s167 = scalar_lea.vmem %s0, %s166
        %s168 = smul.u32 64, %s16
      $region28: #{_conv2d_jit.1} parent=23 // pred_fallthru
        _
    $region24: #{_conv2d_jit.1} parent=5 // pred_fallthru
      _
    %p169 = scmp.le.s32.totalorder 1, %s9
    %p170 = scmp.lt.s32.totalorder %s9, 65
    %p171 = pnand %p169, %p170
    %p172 = pneg %p171
    // Predicated region
    $region29: #{_conv2d_jit.1} parent=5 // pred_check
      _
    $region30: #{_conv2d_jit.1} parent=5 // pred_check_branch
      %174 = sbr.rel (%p171) target = $region32
    $region31: #{_conv2d_jit.1} parent=5 // pred_region
      %s175 = ssub.s32 %s9, 1
      %s176 = smul.u32 64, %s18
      %p177 = scmp.lt.s32.totalorder %s176, 4095
      %s178 = scalar_select %p177, %s176, 4095
      %s179 = smul.addr %s178, 2
      %s180 = smul.addr %s179, 4
      %s181 = scalar_lea.vmem %s0, %s180
      %p182 = pneg %p47
      %p183 = pneg %p44
      %p184 = scmp.lt.s32.totalorder %s19, 0
      %s185 = scalar_select %p184, %s19, 0
      %s186 = smul.addr %s185, 4
      %s187 = scalar_lea.vmem %s1, %s186
      %p188 = pneg %p73
      %p189 = pneg %p70
      %p190 = scmp.lt.s32.totalorder %s19, 0
      %s191 = scalar_select %p190, %s19, 0
      %s192 = scalar_lea.vmem %s2, %s191
      %p193 = pneg %p99
      %p194 = pneg %p96
      %p195 = pneg %p127
      %p196 = pneg %p124
      %s197 = smul.u32 64, %s18
      %p198 = scmp.lt.s32.totalorder %s197, 4095
      %s199 = scalar_select %p198, %s197, 4095
      %p200 = scmp.lt.s32.totalorder %s19, 0
      %s201 = scalar_select %p200, %s19, 0
      %s202 = sadd.s32 %s201, %s199
      %s203 = smul.addr %s202, 8
      %s204 = scalar_lea.vmem %s3, %s203
      %s205 = smul.u32 64, %s18
      %p206 = scmp.lt.s32.totalorder %s205, 4095
      %s207 = scalar_select %p206, %s205, 4095
      %s208 = smul.addr %s207, 2
      %s209 = smul.addr %s208, 4
      %s210 = scalar_lea.vmem %s0, %s209
      %s211 = smul.u32 64, %s18
      %p212 = scmp.lt.s32.totalorder %s19, 0
      %s213 = scalar_select %p212, %s19, 0
      %s214 = smul.addr %s213, 4
      %s215 = scalar_lea.vmem %s1, %s214
      %p216 = scmp.lt.s32.totalorder %s19, 0
      %s217 = scalar_select %p216, %s19, 0
      %s218 = scalar_lea.vmem %s2, %s217
      %s219 = smul.u32 64, %s18
      %p220 = scmp.lt.s32.totalorder %s219, 4095
      %s221 = scalar_select %p220, %s219, 4095
      %p222 = scmp.lt.s32.totalorder %s19, 0
      %s223 = scalar_select %p222, %s19, 0
      %s224 = sadd.s32 %s223, %s221
      %s225 = smul.addr %s224, 8
      %s226 = scalar_lea.vmem %s3, %s225
      %s227 = smul.u32 64, %s18
      %v229 = vld [vmem:[%s210] sm:$0xff]
      %v230 = vld [vmem:[%s210 + $0x8] sm:$0xff]
      %v231 = vld [vmem:[%s210 + $0x10] sm:$0xff]
      %v232 = vld [vmem:[%s210 + $0x18] sm:$0xff]
      %v233 = vld [vmem:[%s210 + $0x20] sm:$0xff]
      %v234 = vld [vmem:[%s210 + $0x28] sm:$0xff]
      %v235 = vld [vmem:[%s210 + $0x30] sm:$0xff]
      %v236 = vld [vmem:[%s210 + $0x38] sm:$0xff]
      %v237 = vld [vmem:[%s210 + $0x40] sm:$0xff]
      %v238 = vld [vmem:[%s210 + $0x48] sm:$0xff]
      %v239 = vld [vmem:[%s210 + $0x50] sm:$0xff]
      %v240 = vld [vmem:[%s210 + $0x58] sm:$0xff]
      %v241 = vld [vmem:[%s210 + $0x60] sm:$0xff]
      %v242 = vld [vmem:[%s210 + $0x68] sm:$0xff]
      %v243 = vld [vmem:[%s210 + $0x70] sm:$0xff]
      %v244 = vld [vmem:[%s210 + $0x78] sm:$0xff]
      %v245 = vld [vmem:[%s210 + $0x80] sm:$0xff]
      %v246 = vld [vmem:[%s210 + $0x88] sm:$0xff]
      %v247 = vld [vmem:[%s210 + $0x90] sm:$0xff]
      %v248 = vld [vmem:[%s210 + $0x98] sm:$0xff]
      %v249 = vld [vmem:[%s210 + $0xa0] sm:$0xff]
      %v250 = vld [vmem:[%s210 + $0xa8] sm:$0xff]
      %v251 = vld [vmem:[%s210 + $0xb0] sm:$0xff]
      %v252 = vld [vmem:[%s210 + $0xb8] sm:$0xff]
      %v253 = vld [vmem:[%s210 + $0xc0] sm:$0xff]
      %v254 = vld [vmem:[%s210 + $0xc8] sm:$0xff]
      %v255 = vld [vmem:[%s210 + $0xd0] sm:$0xff]
      %v256 = vld [vmem:[%s210 + $0xd8] sm:$0xff]
      %v257 = vld [vmem:[%s210 + $0xe0] sm:$0xff]
      %v258 = vld [vmem:[%s210 + $0xe8] sm:$0xff]
      %v259 = vld [vmem:[%s210 + $0xf0] sm:$0xff]
      %v260 = vld [vmem:[%s210 + $0xf8] sm:$0xff]
      %v261 = vld [vmem:[%s210 + $0x100] sm:$0xff]
      %v262 = vld [vmem:[%s210 + $0x108] sm:$0xff]
      %v263 = vld [vmem:[%s210 + $0x110] sm:$0xff]
      %v264 = vld [vmem:[%s210 + $0x118] sm:$0xff]
      %v265 = vld [vmem:[%s210 + $0x120] sm:$0xff]
      %v266 = vld [vmem:[%s210 + $0x128] sm:$0xff]
      %v267 = vld [vmem:[%s210 + $0x130] sm:$0xff]
      %v268 = vld [vmem:[%s210 + $0x138] sm:$0xff]
      %v269 = vld [vmem:[%s210 + $0x140] sm:$0xff]
      %v270 = vld [vmem:[%s210 + $0x148] sm:$0xff]
      %v271 = vld [vmem:[%s210 + $0x150] sm:$0xff]
      %v272 = vld [vmem:[%s210 + $0x158] sm:$0xff]
      %v273 = vld [vmem:[%s210 + $0x160] sm:$0xff]
      %v274 = vld [vmem:[%s210 + $0x168] sm:$0xff]
      %v275 = vld [vmem:[%s210 + $0x170] sm:$0xff]
      %v276 = vld [vmem:[%s210 + $0x178] sm:$0xff]
      %v277 = vld [vmem:[%s210 + $0x180] sm:$0xff]
      %v278 = vld [vmem:[%s210 + $0x188] sm:$0xff]
      %v279 = vld [vmem:[%s210 + $0x190] sm:$0xff]
      %v280 = vld [vmem:[%s210 + $0x198] sm:$0xff]
      %v281 = vld [vmem:[%s210 + $0x1a0] sm:$0xff]
      %v282 = vld [vmem:[%s210 + $0x1a8] sm:$0xff]
      %v283 = vld [vmem:[%s210 + $0x1b0] sm:$0xff]
      %v284 = vld [vmem:[%s210 + $0x1b8] sm:$0xff]
      %v285 = vld [vmem:[%s210 + $0x1c0] sm:$0xff]
      %v286 = vld [vmem:[%s210 + $0x1c8] sm:$0xff]
      %v287 = vld [vmem:[%s210 + $0x1d0] sm:$0xff]
      %v288 = vld [vmem:[%s210 + $0x1d8] sm:$0xff]
      %v289 = vld [vmem:[%s210 + $0x1e0] sm:$0xff]
      %v290 = vld [vmem:[%s210 + $0x1e8] sm:$0xff]
      %v291 = vld [vmem:[%s210 + $0x1f0] sm:$0xff]
      %v292 = vld [vmem:[%s210 + $0x1f8] sm:$0xff]
      %v293 = vld [vmem:[%s215] sm:$0xf]
      %v294 = vld [vmem:[%s215 + $0x4] sm:$0xf]
      %v295 = vld [vmem:[%s215 + $0x8] sm:$0xf]
      %v296 = vld [vmem:[%s215 + $0xc] sm:$0xf]
      %v297 = vld [vmem:[%s215 + $0x10] sm:$0xf]
      %v298 = vld [vmem:[%s215 + $0x14] sm:$0xf]
      %v299 = vld [vmem:[%s215 + $0x18] sm:$0xf]
      %v300 = vld [vmem:[%s215 + $0x1c] sm:$0xf]
      %v301 = vld [vmem:[%s215 + $0x20] sm:$0xf]
      %v302 = vld [vmem:[%s215 + $0x24] sm:$0xf]
      %v303 = vld [vmem:[%s215 + $0x28] sm:$0xf]
      %v304 = vld [vmem:[%s215 + $0x2c] sm:$0xf]
      %v305 = vld [vmem:[%s215 + $0x30] sm:$0xf]
      %v306 = vld [vmem:[%s215 + $0x34] sm:$0xf]
      %v307 = vld [vmem:[%s215 + $0x38] sm:$0xf]
      %v308 = vld [vmem:[%s215 + $0x3c] sm:$0xf]
      %v309 = vld [vmem:[%s215 + $0x40] sm:$0xf]
      %v310 = vld [vmem:[%s215 + $0x44] sm:$0xf]
      %v311 = vld [vmem:[%s215 + $0x48] sm:$0x3]
      %v312 = vld [vmem:[%s218] sm:$0x1]
      %v314 = vperm.slane %v312, 0
      %v380 = vunpack.c.l.b16 %v229
      %v381 = vunpack.c.h.b16 %v229
      %v382 = vunpack.c.l.b16 %v230
      %v383 = vunpack.c.h.b16 %v230
      %v384 = vunpack.c.l.b16 %v231
      %v385 = vunpack.c.h.b16 %v231
      %v386 = vunpack.c.l.b16 %v232
      %v387 = vunpack.c.h.b16 %v232
      %v388 = vunpack.c.l.b16 %v233
      %v389 = vunpack.c.h.b16 %v233
      %v390 = vunpack.c.l.b16 %v234
      %v391 = vunpack.c.h.b16 %v234
      %v392 = vunpack.c.l.b16 %v235
      %v393 = vunpack.c.h.b16 %v235
      %v394 = vunpack.c.l.b16 %v236
      %v395 = vunpack.c.h.b16 %v236
      %v396 = vunpack.c.l.b16 %v237
      %v397 = vunpack.c.h.b16 %v237
      %v398 = vunpack.c.l.b16 %v238
      %v399 = vunpack.c.h.b16 %v238
      %v400 = vunpack.c.l.b16 %v239
      %v401 = vunpack.c.h.b16 %v239
      %v402 = vunpack.c.l.b16 %v240
      %v403 = vunpack.c.h.b16 %v240
      %v404 = vunpack.c.l.b16 %v241
      %v405 = vunpack.c.h.b16 %v241
      %v406 = vunpack.c.l.b16 %v242
      %v407 = vunpack.c.h.b16 %v242
      %v408 = vunpack.c.l.b16 %v243
      %v409 = vunpack.c.h.b16 %v243
      %v410 = vunpack.c.l.b16 %v244
      %v411 = vunpack.c.h.b16 %v244
      %v412 = vunpack.c.l.b16 %v245
      %v413 = vunpack.c.h.b16 %v245
      %v414 = vunpack.c.l.b16 %v246
      %v415 = vunpack.c.h.b16 %v246
      %v416 = vunpack.c.l.b16 %v247
      %v417 = vunpack.c.h.b16 %v247
      %v418 = vunpack.c.l.b16 %v248
      %v419 = vunpack.c.h.b16 %v248
      %v420 = vunpack.c.l.b16 %v249
      %v421 = vunpack.c.h.b16 %v249
      %v422 = vunpack.c.l.b16 %v250
      %v423 = vunpack.c.h.b16 %v250
      %v424 = vunpack.c.l.b16 %v251
      %v425 = vunpack.c.h.b16 %v251
      %v426 = vunpack.c.l.b16 %v252
      %v427 = vunpack.c.h.b16 %v252
      %v428 = vunpack.c.l.b16 %v253
      %v429 = vunpack.c.h.b16 %v253
      %v430 = vunpack.c.l.b16 %v254
      %v431 = vunpack.c.h.b16 %v254
      %v432 = vunpack.c.l.b16 %v255
      %v433 = vunpack.c.h.b16 %v255
      %v434 = vunpack.c.l.b16 %v256
      %v435 = vunpack.c.h.b16 %v256
      %v436 = vunpack.c.l.b16 %v257
      %v437 = vunpack.c.h.b16 %v257
      %v438 = vunpack.c.l.b16 %v258
      %v439 = vunpack.c.h.b16 %v258
      %v440 = vunpack.c.l.b16 %v259
      %v441 = vunpack.c.h.b16 %v259
      %v442 = vunpack.c.l.b16 %v260
      %v443 = vunpack.c.h.b16 %v260
      %v444 = vunpack.c.l.b16 %v261
      %v445 = vunpack.c.h.b16 %v261
      %v446 = vunpack.c.l.b16 %v262
      %v447 = vunpack.c.h.b16 %v262
      %v448 = vunpack.c.l.b16 %v263
      %v449 = vunpack.c.h.b16 %v263
      %v450 = vunpack.c.l.b16 %v264
      %v451 = vunpack.c.h.b16 %v264
      %v452 = vunpack.c.l.b16 %v265
      %v453 = vunpack.c.h.b16 %v265
      %v454 = vunpack.c.l.b16 %v266
      %v455 = vunpack.c.h.b16 %v266
      %v456 = vunpack.c.l.b16 %v267
      %v457 = vunpack.c.h.b16 %v267
      %v458 = vunpack.c.l.b16 %v268
      %v459 = vunpack.c.h.b16 %v268
      %v460 = vunpack.c.l.b16 %v269
      %v461 = vunpack.c.h.b16 %v269
      %v462 = vunpack.c.l.b16 %v270
      %v463 = vunpack.c.h.b16 %v270
      %v464 = vunpack.c.l.b16 %v271
      %v465 = vunpack.c.h.b16 %v271
      %v466 = vunpack.c.l.b16 %v272
      %v467 = vunpack.c.h.b16 %v272
      %v468 = vunpack.c.l.b16 %v273
      %v469 = vunpack.c.h.b16 %v273
      %v470 = vunpack.c.l.b16 %v274
      %v471 = vunpack.c.h.b16 %v274
      %v472 = vunpack.c.l.b16 %v275
      %v473 = vunpack.c.h.b16 %v275
      %v474 = vunpack.c.l.b16 %v276
      %v475 = vunpack.c.h.b16 %v276
      %v476 = vunpack.c.l.b16 %v277
      %v477 = vunpack.c.h.b16 %v277
      %v478 = vunpack.c.l.b16 %v278
      %v479 = vunpack.c.h.b16 %v278
      %v480 = vunpack.c.l.b16 %v279
      %v481 = vunpack.c.h.b16 %v279
      %v482 = vunpack.c.l.b16 %v280
      %v483 = vunpack.c.h.b16 %v280
      %v484 = vunpack.c.l.b16 %v281
      %v485 = vunpack.c.h.b16 %v281
      %v486 = vunpack.c.l.b16 %v282
      %v487 = vunpack.c.h.b16 %v282
      %v488 = vunpack.c.l.b16 %v283
      %v489 = vunpack.c.h.b16 %v283
      %v490 = vunpack.c.l.b16 %v284
      %v491 = vunpack.c.h.b16 %v284
      %v492 = vunpack.c.l.b16 %v285
      %v493 = vunpack.c.h.b16 %v285
      %v494 = vunpack.c.l.b16 %v286
      %v495 = vunpack.c.h.b16 %v286
      %v496 = vunpack.c.l.b16 %v287
      %v497 = vunpack.c.h.b16 %v287
      %v498 = vunpack.c.l.b16 %v288
      %v499 = vunpack.c.h.b16 %v288
      %v500 = vunpack.c.l.b16 %v289
      %v501 = vunpack.c.h.b16 %v289
      %v502 = vunpack.c.l.b16 %v290
      %v503 = vunpack.c.h.b16 %v290
      %v504 = vunpack.c.l.b16 %v291
      %v505 = vunpack.c.h.b16 %v291
      %v506 = vunpack.c.l.b16 %v292
      %v507 = vunpack.c.h.b16 %v292
      %v508 = vpack.c.b16 %v382, %v380
      %v509 = vpack.c.b16 %v383, %v381
      %v510 = vpack.c.b16 %v386, %v384
      %v511 = vpack.c.b16 %v387, %v385
      %v512 = vpack.c.b16 %v390, %v388
      %v513 = vpack.c.b16 %v391, %v389
      %v514 = vpack.c.b16 %v394, %v392
      %v515 = vpack.c.b16 %v395, %v393
      %v516 = vpack.c.b16 %v398, %v396
      %v517 = vpack.c.b16 %v399, %v397
      %v518 = vpack.c.b16 %v402, %v400
      %v519 = vpack.c.b16 %v403, %v401
      %v520 = vpack.c.b16 %v406, %v404
      %v521 = vpack.c.b16 %v407, %v405
      %v522 = vpack.c.b16 %v410, %v408
      %v523 = vpack.c.b16 %v411, %v409
      %v524 = vpack.c.b16 %v414, %v412
      %v525 = vpack.c.b16 %v415, %v413
      %v526 = vpack.c.b16 %v418, %v416
      %v527 = vpack.c.b16 %v419, %v417
      %v528 = vpack.c.b16 %v422, %v420
      %v529 = vpack.c.b16 %v423, %v421
      %v530 = vpack.c.b16 %v426, %v424
      %v531 = vpack.c.b16 %v427, %v425
      %v532 = vpack.c.b16 %v430, %v428
      %v533 = vpack.c.b16 %v431, %v429
      %v534 = vpack.c.b16 %v434, %v432
      %v535 = vpack.c.b16 %v435, %v433
      %v536 = vpack.c.b16 %v438, %v436
      %v537 = vpack.c.b16 %v439, %v437
      %v538 = vpack.c.b16 %v442, %v440
      %v539 = vpack.c.b16 %v443, %v441
      %v540 = vpack.c.b16 %v446, %v444
      %v541 = vpack.c.b16 %v447, %v445
      %v542 = vpack.c.b16 %v450, %v448
      %v543 = vpack.c.b16 %v451, %v449
      %v544 = vpack.c.b16 %v454, %v452
      %v545 = vpack.c.b16 %v455, %v453
      %v546 = vpack.c.b16 %v458, %v456
      %v547 = vpack.c.b16 %v459, %v457
      %v548 = vpack.c.b16 %v462, %v460
      %v549 = vpack.c.b16 %v463, %v461
      %v550 = vpack.c.b16 %v466, %v464
      %v551 = vpack.c.b16 %v467, %v465
      %v552 = vpack.c.b16 %v470, %v468
      %v553 = vpack.c.b16 %v471, %v469
      %v554 = vpack.c.b16 %v474, %v472
      %v555 = vpack.c.b16 %v475, %v473
      %v556 = vpack.c.b16 %v478, %v476
      %v557 = vpack.c.b16 %v479, %v477
      %v558 = vpack.c.b16 %v482, %v480
      %v559 = vpack.c.b16 %v483, %v481
      %v560 = vpack.c.b16 %v486, %v484
      %v561 = vpack.c.b16 %v487, %v485
      %v562 = vpack.c.b16 %v490, %v488
      %v563 = vpack.c.b16 %v491, %v489
      %v564 = vpack.c.b16 %v494, %v492
      %v565 = vpack.c.b16 %v495, %v493
      %v566 = vpack.c.b16 %v498, %v496
      %v567 = vpack.c.b16 %v499, %v497
      %v568 = vpack.c.b16 %v502, %v500
      %v569 = vpack.c.b16 %v503, %v501
      %v570 = vpack.c.b16 %v506, %v504
      %v571 = vpack.c.b16 %v507, %v505
      %v623 = vunpack.c.l.b16 %v293
      %v624 = vunpack.c.l.b16 %v294
      %v625 = vunpack.c.l.b16 %v295
      %v626 = vunpack.c.l.b16 %v296
      %v627 = vunpack.c.l.b16 %v297
      %v628 = vunpack.c.l.b16 %v298
      %v629 = vunpack.c.l.b16 %v299
      %v630 = vunpack.c.l.b16 %v300
      %v631 = vunpack.c.l.b16 %v301
      %v632 = vunpack.c.l.b16 %v302
      %v633 = vunpack.c.l.b16 %v303
      %v634 = vunpack.c.l.b16 %v304
      %v635 = vunpack.c.l.b16 %v305
      %v636 = vunpack.c.l.b16 %v306
      %v637 = vunpack.c.l.b16 %v307
      %v638 = vunpack.c.l.b16 %v308
      %v639 = vunpack.c.l.b16 %v309
      %v640 = vunpack.c.l.b16 %v310
      %v641 = vunpack.c.l.b16 %v311
      %v642 = vpack.c.b16 %v624, %v623
      %v643 = vpack.c.b16 %v626, %v625
      %v644 = vpack.c.b16 %v628, %v627
      %v645 = vpack.c.b16 %v630, %v629
      %v646 = vpack.c.b16 %v632, %v631
      %v647 = vpack.c.b16 %v634, %v633
      %v648 = vpack.c.b16 %v636, %v635
      %v649 = vpack.c.b16 %v638, %v637
      %v650 = vpack.c.b16 %v640, %v639
      %v651 = vpack.c.b16 %v641, %v641
      %vm661 = vcmask 154624
      %v663 = vsel %vm661, %v509, 0
      %v666 = vsel %vm661, %v511, 0
      %v669 = vsel %vm661, %v513, 0
      %v672 = vsel %vm661, %v515, 0
      %v675 = vsel %vm661, %v517, 0
      %v678 = vsel %vm661, %v519, 0
      %v681 = vsel %vm661, %v521, 0
      %v684 = vsel %vm661, %v523, 0
      %v687 = vsel %vm661, %v525, 0
      %v690 = vsel %vm661, %v527, 0
      %v693 = vsel %vm661, %v529, 0
      %v696 = vsel %vm661, %v531, 0
      %v699 = vsel %vm661, %v533, 0
      %v702 = vsel %vm661, %v535, 0
      %v705 = vsel %vm661, %v537, 0
      %v708 = vsel %vm661, %v539, 0
      %v711 = vsel %vm661, %v541, 0
      %v714 = vsel %vm661, %v543, 0
      %v717 = vsel %vm661, %v545, 0
      %v720 = vsel %vm661, %v547, 0
      %v723 = vsel %vm661, %v549, 0
      %v726 = vsel %vm661, %v551, 0
      %v729 = vsel %vm661, %v553, 0
      %v732 = vsel %vm661, %v555, 0
      %v735 = vsel %vm661, %v557, 0
      %v738 = vsel %vm661, %v559, 0
      %v741 = vsel %vm661, %v561, 0
      %v744 = vsel %vm661, %v563, 0
      %v747 = vsel %vm661, %v565, 0
      %v750 = vsel %vm661, %v567, 0
      %v753 = vsel %vm661, %v569, 0
      %v756 = vsel %vm661, %v571, 0
      %vm758 = vcmask 1040384
      %vm759 = vcmask 1041408
      %v760 = vsel %vm758, 4294967295, 65535
      %v761 = vsel %vm759, %v760, 0
      %v763 = vand.u32 %v651, %v761
      %765 = vmatpush.bf16.msra.mxu0 %v649
      %766 = vmatpush.bf16.msra.mxu0 %v648
      %767 = vmatpush.bf16.msra.mxu0 %v647
      %768 = vmatpush.bf16.msra.mxu0 %v646
      %769 = vmatpush.bf16.msra.mxu0 %v645
      %770 = vmatpush.bf16.msra.mxu0 %v644
      %771 = vmatpush.bf16.msra.mxu0 %v643
      %772 = vmatpush.bf16.msra.mxu0 %v642
      %773 = vmatmul.bf16.gmra.mxu0 %v508
      %v774 = vpop.f32.mrf.mxu0
      %v775 = vadd.f32 %v314, %v774
      %v776 = vpop.f32.mrf.mxu0
      %v777 = vadd.f32 %v314, %v776
      %778 = vmatmul.bf16.gmra.mxu0 %v510
      %v779 = vpop.f32.mrf.mxu0
      %v780 = vadd.f32 %v314, %v779
      %v781 = vpop.f32.mrf.mxu0
      %v782 = vadd.f32 %v314, %v781
      %783 = vmatmul.bf16.gmra.mxu0 %v512
      %v784 = vpop.f32.mrf.mxu0
      %v785 = vadd.f32 %v314, %v784
      %v786 = vpop.f32.mrf.mxu0
      %v787 = vadd.f32 %v314, %v786
      %788 = vmatmul.bf16.gmra.mxu0 %v514
      %v789 = vpop.f32.mrf.mxu0
      %v790 = vadd.f32 %v314, %v789
      %v791 = vpop.f32.mrf.mxu0
      %v792 = vadd.f32 %v314, %v791
      %793 = vmatmul.bf16.gmra.mxu0 %v516
      %v794 = vpop.f32.mrf.mxu0
      %v795 = vadd.f32 %v314, %v794
      %v796 = vpop.f32.mrf.mxu0
      %v797 = vadd.f32 %v314, %v796
      %798 = vmatmul.bf16.gmra.mxu0 %v518
      %v799 = vpop.f32.mrf.mxu0
      %v800 = vadd.f32 %v314, %v799
      %v801 = vpop.f32.mrf.mxu0
      %v802 = vadd.f32 %v314, %v801
      %803 = vmatmul.bf16.gmra.mxu0 %v520
      %v804 = vpop.f32.mrf.mxu0
      %v805 = vadd.f32 %v314, %v804
      %v806 = vpop.f32.mrf.mxu0
      %v807 = vadd.f32 %v314, %v806
      %808 = vmatmul.bf16.gmra.mxu0 %v522
      %v809 = vpop.f32.mrf.mxu0
      %v810 = vadd.f32 %v314, %v809
      %v811 = vpop.f32.mrf.mxu0
      %v812 = vadd.f32 %v314, %v811
      %813 = vmatmul.bf16.gmra.mxu0 %v524
      %v814 = vpop.f32.mrf.mxu0
      %v815 = vadd.f32 %v314, %v814
      %v816 = vpop.f32.mrf.mxu0
      %v817 = vadd.f32 %v314, %v816
      %818 = vmatmul.bf16.gmra.mxu0 %v526
      %v819 = vpop.f32.mrf.mxu0
      %v820 = vadd.f32 %v314, %v819
      %v821 = vpop.f32.mrf.mxu0
      %v822 = vadd.f32 %v314, %v821
      %823 = vmatmul.bf16.gmra.mxu0 %v528
      %v824 = vpop.f32.mrf.mxu0
      %v825 = vadd.f32 %v314, %v824
      %v826 = vpop.f32.mrf.mxu0
      %v827 = vadd.f32 %v314, %v826
      %828 = vmatmul.bf16.gmra.mxu0 %v530
      %v829 = vpop.f32.mrf.mxu0
      %v830 = vadd.f32 %v314, %v829
      %v831 = vpop.f32.mrf.mxu0
      %v832 = vadd.f32 %v314, %v831
      %833 = vmatmul.bf16.gmra.mxu0 %v532
      %v834 = vpop.f32.mrf.mxu0
      %v835 = vadd.f32 %v314, %v834
      %v836 = vpop.f32.mrf.mxu0
      %v837 = vadd.f32 %v314, %v836
      %838 = vmatmul.bf16.gmra.mxu0 %v534
      %v839 = vpop.f32.mrf.mxu0
      %v840 = vadd.f32 %v314, %v839
      %v841 = vpop.f32.mrf.mxu0
      %v842 = vadd.f32 %v314, %v841
      %843 = vmatmul.bf16.gmra.mxu0 %v536
      %v844 = vpop.f32.mrf.mxu0
      %v845 = vadd.f32 %v314, %v844
      %v846 = vpop.f32.mrf.mxu0
      %v847 = vadd.f32 %v314, %v846
      %848 = vmatmul.bf16.gmra.mxu0 %v538
      %v849 = vpop.f32.mrf.mxu0
      %v850 = vadd.f32 %v314, %v849
      %v851 = vpop.f32.mrf.mxu0
      %v852 = vadd.f32 %v314, %v851
      %853 = vmatmul.bf16.gmra.mxu0 %v540
      %v854 = vpop.f32.mrf.mxu0
      %v855 = vadd.f32 %v314, %v854
      %v856 = vpop.f32.mrf.mxu0
      %v857 = vadd.f32 %v314, %v856
      %858 = vmatmul.bf16.gmra.mxu0 %v542
      %v859 = vpop.f32.mrf.mxu0
      %v860 = vadd.f32 %v314, %v859
      %v861 = vpop.f32.mrf.mxu0
      %v862 = vadd.f32 %v314, %v861
      %863 = vmatmul.bf16.gmra.mxu0 %v544
      %v864 = vpop.f32.mrf.mxu0
      %v865 = vadd.f32 %v314, %v864
      %v866 = vpop.f32.mrf.mxu0
      %v867 = vadd.f32 %v314, %v866
      %868 = vmatmul.bf16.gmra.mxu0 %v546
      %v869 = vpop.f32.mrf.mxu0
      %v870 = vadd.f32 %v314, %v869
      %v871 = vpop.f32.mrf.mxu0
      %v872 = vadd.f32 %v314, %v871
      %873 = vmatmul.bf16.gmra.mxu0 %v548
      %v874 = vpop.f32.mrf.mxu0
      %v875 = vadd.f32 %v314, %v874
      %v876 = vpop.f32.mrf.mxu0
      %v877 = vadd.f32 %v314, %v876
      %878 = vmatmul.bf16.gmra.mxu0 %v550
      %v879 = vpop.f32.mrf.mxu0
      %v880 = vadd.f32 %v314, %v879
      %v881 = vpop.f32.mrf.mxu0
      %v882 = vadd.f32 %v314, %v881
      %883 = vmatmul.bf16.gmra.mxu0 %v552
      %v884 = vpop.f32.mrf.mxu0
      %v885 = vadd.f32 %v314, %v884
      %v886 = vpop.f32.mrf.mxu0
      %v887 = vadd.f32 %v314, %v886
      %888 = vmatmul.bf16.gmra.mxu0 %v554
      %v889 = vpop.f32.mrf.mxu0
      %v890 = vadd.f32 %v314, %v889
      %v891 = vpop.f32.mrf.mxu0
      %v892 = vadd.f32 %v314, %v891
      %893 = vmatmul.bf16.gmra.mxu0 %v556
      %v894 = vpop.f32.mrf.mxu0
      %v895 = vadd.f32 %v314, %v894
      %v896 = vpop.f32.mrf.mxu0
      %v897 = vadd.f32 %v314, %v896
      %898 = vmatmul.bf16.gmra.mxu0 %v558
      %v899 = vpop.f32.mrf.mxu0
      %v900 = vadd.f32 %v314, %v899
      %v901 = vpop.f32.mrf.mxu0
      %v902 = vadd.f32 %v314, %v901
      %903 = vmatmul.bf16.gmra.mxu0 %v560
      %v904 = vpop.f32.mrf.mxu0
      %v905 = vadd.f32 %v314, %v904
      %v906 = vpop.f32.mrf.mxu0
      %v907 = vadd.f32 %v314, %v906
      %908 = vmatmul.bf16.gmra.mxu0 %v562
      %v909 = vpop.f32.mrf.mxu0
      %v910 = vadd.f32 %v314, %v909
      %v911 = vpop.f32.mrf.mxu0
      %v912 = vadd.f32 %v314, %v911
      %913 = vmatmul.bf16.gmra.mxu0 %v564
      %v914 = vpop.f32.mrf.mxu0
      %v915 = vadd.f32 %v314, %v914
      %v916 = vpop.f32.mrf.mxu0
      %v917 = vadd.f32 %v314, %v916
      %918 = vmatmul.bf16.gmra.mxu0 %v566
      %v919 = vpop.f32.mrf.mxu0
      %v920 = vadd.f32 %v314, %v919
      %v921 = vpop.f32.mrf.mxu0
      %v922 = vadd.f32 %v314, %v921
      %923 = vmatmul.bf16.gmra.mxu0 %v568
      %v924 = vpop.f32.mrf.mxu0
      %v925 = vadd.f32 %v314, %v924
      %v926 = vpop.f32.mrf.mxu0
      %v927 = vadd.f32 %v314, %v926
      %928 = vmatmul.bf16.gmra.mxu0 %v570
      %v929 = vpop.f32.mrf.mxu0
      %v930 = vadd.f32 %v314, %v929
      %v931 = vpop.f32.mrf.mxu0
      %v932 = vadd.f32 %v314, %v931
      %933 = vdwg.mxu0
      %934 = vmatpush.bf16.msra.mxu0 0
      %935 = vmatpush.bf16.msra.mxu0 0
      %936 = vmatpush.bf16.msra.mxu0 0
      %937 = vmatpush.bf16.msra.mxu0 0
      %938 = vmatpush.bf16.msra.mxu0 0
      %939 = vmatpush.bf16.msra.mxu0 0
      %940 = vmatpush.bf16.msra.mxu0 %v763
      %941 = vmatpush.bf16.msra.mxu0 %v650
      %942 = vmatmul.bf16.gmra.mxu0 %v663
      %v943 = vpop.f32.mrf.mxu0
      %v944 = vadd.f32 %v775, %v943
      %v945 = vpop.f32.mrf.mxu0
      %v946 = vadd.f32 %v777, %v945
      %947 = vmatmul.bf16.gmra.mxu0 %v666
      %v948 = vpop.f32.mrf.mxu0
      %v949 = vadd.f32 %v780, %v948
      %v950 = vpop.f32.mrf.mxu0
      %v951 = vadd.f32 %v782, %v950
      %952 = vmatmul.bf16.gmra.mxu0 %v669
      %v953 = vpop.f32.mrf.mxu0
      %v954 = vadd.f32 %v785, %v953
      %v955 = vpop.f32.mrf.mxu0
      %v956 = vadd.f32 %v787, %v955
      %957 = vmatmul.bf16.gmra.mxu0 %v672
      %v958 = vpop.f32.mrf.mxu0
      %v959 = vadd.f32 %v790, %v958
      %v960 = vpop.f32.mrf.mxu0
      %v961 = vadd.f32 %v792, %v960
      %962 = vmatmul.bf16.gmra.mxu0 %v675
      %v963 = vpop.f32.mrf.mxu0
      %v964 = vadd.f32 %v795, %v963
      %v965 = vpop.f32.mrf.mxu0
      %v966 = vadd.f32 %v797, %v965
      %967 = vmatmul.bf16.gmra.mxu0 %v678
      %v968 = vpop.f32.mrf.mxu0
      %v969 = vadd.f32 %v800, %v968
      %v970 = vpop.f32.mrf.mxu0
      %v971 = vadd.f32 %v802, %v970
      %972 = vmatmul.bf16.gmra.mxu0 %v681
      %v973 = vpop.f32.mrf.mxu0
      %v974 = vadd.f32 %v805, %v973
      %v975 = vpop.f32.mrf.mxu0
      %v976 = vadd.f32 %v807, %v975
      %977 = vmatmul.bf16.gmra.mxu0 %v684
      %v978 = vpop.f32.mrf.mxu0
      %v979 = vadd.f32 %v810, %v978
      %v980 = vpop.f32.mrf.mxu0
      %v981 = vadd.f32 %v812, %v980
      %982 = vmatmul.bf16.gmra.mxu0 %v687
      %v983 = vpop.f32.mrf.mxu0
      %v984 = vadd.f32 %v815, %v983
      %v985 = vpop.f32.mrf.mxu0
      %v986 = vadd.f32 %v817, %v985
      %987 = vmatmul.bf16.gmra.mxu0 %v690
      %v988 = vpop.f32.mrf.mxu0
      %v989 = vadd.f32 %v820, %v988
      %v990 = vpop.f32.mrf.mxu0
      %v991 = vadd.f32 %v822, %v990
      %992 = vmatmul.bf16.gmra.mxu0 %v693
      %v993 = vpop.f32.mrf.mxu0
      %v994 = vadd.f32 %v825, %v993
      %v995 = vpop.f32.mrf.mxu0
      %v996 = vadd.f32 %v827, %v995
      %997 = vmatmul.bf16.gmra.mxu0 %v696
      %v998 = vpop.f32.mrf.mxu0
      %v999 = vadd.f32 %v830, %v998
      %v1000 = vpop.f32.mrf.mxu0
      %v1001 = vadd.f32 %v832, %v1000
      %1002 = vmatmul.bf16.gmra.mxu0 %v699
      %v1003 = vpop.f32.mrf.mxu0
      %v1004 = vadd.f32 %v835, %v1003
      %v1005 = vpop.f32.mrf.mxu0
      %v1006 = vadd.f32 %v837, %v1005
      %1007 = vmatmul.bf16.gmra.mxu0 %v702
      %v1008 = vpop.f32.mrf.mxu0
      %v1009 = vadd.f32 %v840, %v1008
      %v1010 = vpop.f32.mrf.mxu0
      %v1011 = vadd.f32 %v842, %v1010
      %1012 = vmatmul.bf16.gmra.mxu0 %v705
      %v1013 = vpop.f32.mrf.mxu0
      %v1014 = vadd.f32 %v845, %v1013
      %v1015 = vpop.f32.mrf.mxu0
      %v1016 = vadd.f32 %v847, %v1015
      %1017 = vmatmul.bf16.gmra.mxu0 %v708
      %v1018 = vpop.f32.mrf.mxu0
      %v1019 = vadd.f32 %v850, %v1018
      %v1020 = vpop.f32.mrf.mxu0
      %v1021 = vadd.f32 %v852, %v1020
      %1022 = vmatmul.bf16.gmra.mxu0 %v711
      %v1023 = vpop.f32.mrf.mxu0
      %v1024 = vadd.f32 %v855, %v1023
      %v1025 = vpop.f32.mrf.mxu0
      %v1026 = vadd.f32 %v857, %v1025
      %1027 = vmatmul.bf16.gmra.mxu0 %v714
      %v1028 = vpop.f32.mrf.mxu0
      %v1029 = vadd.f32 %v860, %v1028
      %v1030 = vpop.f32.mrf.mxu0
      %v1031 = vadd.f32 %v862, %v1030
      %1032 = vmatmul.bf16.gmra.mxu0 %v717
      %v1033 = vpop.f32.mrf.mxu0
      %v1034 = vadd.f32 %v865, %v1033
      %v1035 = vpop.f32.mrf.mxu0
      %v1036 = vadd.f32 %v867, %v1035
      %1037 = vmatmul.bf16.gmra.mxu0 %v720
      %v1038 = vpop.f32.mrf.mxu0
      %v1039 = vadd.f32 %v870, %v1038
      %v1040 = vpop.f32.mrf.mxu0
      %v1041 = vadd.f32 %v872, %v1040
      %1042 = vmatmul.bf16.gmra.mxu0 %v723
      %v1043 = vpop.f32.mrf.mxu0
      %v1044 = vadd.f32 %v875, %v1043
      %v1045 = vpop.f32.mrf.mxu0
      %v1046 = vadd.f32 %v877, %v1045
      %1047 = vmatmul.bf16.gmra.mxu0 %v726
      %v1048 = vpop.f32.mrf.mxu0
      %v1049 = vadd.f32 %v880, %v1048
      %v1050 = vpop.f32.mrf.mxu0
      %v1051 = vadd.f32 %v882, %v1050
      %1052 = vmatmul.bf16.gmra.mxu0 %v729
      %v1053 = vpop.f32.mrf.mxu0
      %v1054 = vadd.f32 %v885, %v1053
      %v1055 = vpop.f32.mrf.mxu0
      %v1056 = vadd.f32 %v887, %v1055
      %1057 = vmatmul.bf16.gmra.mxu0 %v732
      %v1058 = vpop.f32.mrf.mxu0
      %v1059 = vadd.f32 %v890, %v1058
      %v1060 = vpop.f32.mrf.mxu0
      %v1061 = vadd.f32 %v892, %v1060
      %1062 = vmatmul.bf16.gmra.mxu0 %v735
      %v1063 = vpop.f32.mrf.mxu0
      %v1064 = vadd.f32 %v895, %v1063
      %v1065 = vpop.f32.mrf.mxu0
      %v1066 = vadd.f32 %v897, %v1065
      %1067 = vmatmul.bf16.gmra.mxu0 %v738
      %v1068 = vpop.f32.mrf.mxu0
      %v1069 = vadd.f32 %v900, %v1068
      %v1070 = vpop.f32.mrf.mxu0
      %v1071 = vadd.f32 %v902, %v1070
      %1072 = vmatmul.bf16.gmra.mxu0 %v741
      %v1073 = vpop.f32.mrf.mxu0
      %v1074 = vadd.f32 %v905, %v1073
      %v1075 = vpop.f32.mrf.mxu0
      %v1076 = vadd.f32 %v907, %v1075
      %1077 = vmatmul.bf16.gmra.mxu0 %v744
      %v1078 = vpop.f32.mrf.mxu0
      %v1079 = vadd.f32 %v910, %v1078
      %v1080 = vpop.f32.mrf.mxu0
      %v1081 = vadd.f32 %v912, %v1080
      %1082 = vmatmul.bf16.gmra.mxu0 %v747
      %v1083 = vpop.f32.mrf.mxu0
      %v1084 = vadd.f32 %v915, %v1083
      %v1085 = vpop.f32.mrf.mxu0
      %v1086 = vadd.f32 %v917, %v1085
      %1087 = vmatmul.bf16.gmra.mxu0 %v750
      %v1088 = vpop.f32.mrf.mxu0
      %v1089 = vadd.f32 %v920, %v1088
      %v1090 = vpop.f32.mrf.mxu0
      %v1091 = vadd.f32 %v922, %v1090
      %1092 = vmatmul.bf16.gmra.mxu0 %v753
      %v1093 = vpop.f32.mrf.mxu0
      %v1094 = vadd.f32 %v925, %v1093
      %v1095 = vpop.f32.mrf.mxu0
      %v1096 = vadd.f32 %v927, %v1095
      %1097 = vmatmul.bf16.gmra.mxu0 %v756
      %v1098 = vpop.f32.mrf.mxu0
      %v1099 = vadd.f32 %v930, %v1098
      %v1100 = vpop.f32.mrf.mxu0
      %v1101 = vadd.f32 %v932, %v1100
      %1102 = vdwg.mxu0
      %1103 = vst [vmem:[%s226] sm:$0xff] %v944
      %1104 = vst [vmem:[%s226 + $0x8] sm:$0xff] %v946
      %1105 = vst [vmem:[%s226 + $0x10] sm:$0xff] %v949
      %1106 = vst [vmem:[%s226 + $0x18] sm:$0xff] %v951
      %1107 = vst [vmem:[%s226 + $0x20] sm:$0xff] %v954
      %1108 = vst [vmem:[%s226 + $0x28] sm:$0xff] %v956
      %1109 = vst [vmem:[%s226 + $0x30] sm:$0xff] %v959
      %1110 = vst [vmem:[%s226 + $0x38] sm:$0xff] %v961
      %1111 = vst [vmem:[%s226 + $0x40] sm:$0xff] %v964
      %1112 = vst [vmem:[%s226 + $0x48] sm:$0xff] %v966
      %1113 = vst [vmem:[%s226 + $0x50] sm:$0xff] %v969
      %1114 = vst [vmem:[%s226 + $0x58] sm:$0xff] %v971
      %1115 = vst [vmem:[%s226 + $0x60] sm:$0xff] %v974
      %1116 = vst [vmem:[%s226 + $0x68] sm:$0xff] %v976
      %1117 = vst [vmem:[%s226 + $0x70] sm:$0xff] %v979
      %1118 = vst [vmem:[%s226 + $0x78] sm:$0xff] %v981
      %1119 = vst [vmem:[%s226 + $0x80] sm:$0xff] %v984
      %1120 = vst [vmem:[%s226 + $0x88] sm:$0xff] %v986
      %1121 = vst [vmem:[%s226 + $0x90] sm:$0xff] %v989
      %1122 = vst [vmem:[%s226 + $0x98] sm:$0xff] %v991
      %1123 = vst [vmem:[%s226 + $0xa0] sm:$0xff] %v994
      %1124 = vst [vmem:[%s226 + $0xa8] sm:$0xff] %v996
      %1125 = vst [vmem:[%s226 + $0xb0] sm:$0xff] %v999
      %1126 = vst [vmem:[%s226 + $0xb8] sm:$0xff] %v1001
      %1127 = vst [vmem:[%s226 + $0xc0] sm:$0xff] %v1004
      %1128 = vst [vmem:[%s226 + $0xc8] sm:$0xff] %v1006
      %1129 = vst [vmem:[%s226 + $0xd0] sm:$0xff] %v1009
      %1130 = vst [vmem:[%s226 + $0xd8] sm:$0xff] %v1011
      %1131 = vst [vmem:[%s226 + $0xe0] sm:$0xff] %v1014
      %1132 = vst [vmem:[%s226 + $0xe8] sm:$0xff] %v1016
      %1133 = vst [vmem:[%s226 + $0xf0] sm:$0xff] %v1019
      %1134 = vst [vmem:[%s226 + $0xf8] sm:$0xff] %v1021
      %1135 = vst [vmem:[%s226 + $0x100] sm:$0xff] %v1024
      %1136 = vst [vmem:[%s226 + $0x108] sm:$0xff] %v1026
      %1137 = vst [vmem:[%s226 + $0x110] sm:$0xff] %v1029
      %1138 = vst [vmem:[%s226 + $0x118] sm:$0xff] %v1031
      %1139 = vst [vmem:[%s226 + $0x120] sm:$0xff] %v1034
      %1140 = vst [vmem:[%s226 + $0x128] sm:$0xff] %v1036
      %1141 = vst [vmem:[%s226 + $0x130] sm:$0xff] %v1039
      %1142 = vst [vmem:[%s226 + $0x138] sm:$0xff] %v1041
      %1143 = vst [vmem:[%s226 + $0x140] sm:$0xff] %v1044
      %1144 = vst [vmem:[%s226 + $0x148] sm:$0xff] %v1046
      %1145 = vst [vmem:[%s226 + $0x150] sm:$0xff] %v1049
      %1146 = vst [vmem:[%s226 + $0x158] sm:$0xff] %v1051
      %1147 = vst [vmem:[%s226 + $0x160] sm:$0xff] %v1054
      %1148 = vst [vmem:[%s226 + $0x168] sm:$0xff] %v1056
      %1149 = vst [vmem:[%s226 + $0x170] sm:$0xff] %v1059
      %1150 = vst [vmem:[%s226 + $0x178] sm:$0xff] %v1061
      %1151 = vst [vmem:[%s226 + $0x180] sm:$0xff] %v1064
      %1152 = vst [vmem:[%s226 + $0x188] sm:$0xff] %v1066
      %1153 = vst [vmem:[%s226 + $0x190] sm:$0xff] %v1069
      %1154 = vst [vmem:[%s226 + $0x198] sm:$0xff] %v1071
      %1155 = vst [vmem:[%s226 + $0x1a0] sm:$0xff] %v1074
      %1156 = vst [vmem:[%s226 + $0x1a8] sm:$0xff] %v1076
      %1157 = vst [vmem:[%s226 + $0x1b0] sm:$0xff] %v1079
      %1158 = vst [vmem:[%s226 + $0x1b8] sm:$0xff] %v1081
      %1159 = vst [vmem:[%s226 + $0x1c0] sm:$0xff] %v1084
      %1160 = vst [vmem:[%s226 + $0x1c8] sm:$0xff] %v1086
      %1161 = vst [vmem:[%s226 + $0x1d0] sm:$0xff] %v1089
      %1162 = vst [vmem:[%s226 + $0x1d8] sm:$0xff] %v1091
      %1163 = vst [vmem:[%s226 + $0x1e0] sm:$0xff] %v1094
      %1164 = vst [vmem:[%s226 + $0x1e8] sm:$0xff] %v1096
      %1165 = vst [vmem:[%s226 + $0x1f0] sm:$0xff] %v1099
      %1166 = vst [vmem:[%s226 + $0x1f8] sm:$0xff] %v1101
      %s1167 = smul.u32 64, %s18
      %p1168 = scmp.lt.s32.totalorder %s1167, 4095
      %s1169 = scalar_select %p1168, %s1167, 4095
      %p1170 = scmp.lt.s32.totalorder %s19, 0
      %s1171 = scalar_select %p1170, %s19, 0
      %s1172 = sadd.s32 %s1171, %s1169
      %s1173 = smul.addr %s1172, 8
      %s1174 = scalar_lea.vmem %s3, %s1173
      // Predicated region
      $region33: #{_conv2d_jit.1} parent=31 // pred_check
        %p1175 = pneg %p124
      $region34: #{_conv2d_jit.1} parent=31 // pred_check_branch
        %1177 = sbr.rel (%p1175) target = $region36
      $region35: #{_conv2d_jit.1} parent=31 // pred_region
        %s1178 = smul.u32 64, %s18
      $region36: #{_conv2d_jit.1} parent=31 // pred_fallthru
        _
    $region32: #{_conv2d_jit.1} parent=5 // pred_fallthru
      _
    %p1179 = scmp.le.s32.totalorder 2, %s9
    // Predicated region
    $region37: #{_conv2d_jit.1} parent=5 // pred_check
      %p1180 = pneg %p1179
    $region38: #{_conv2d_jit.1} parent=5 // pred_check_branch
      %1182 = sbr.rel (%p1180) target = $region40
    $region39: #{_conv2d_jit.1} parent=5 // pred_region
      %s1183 = ssub.s32 %s9, 2
      // Predicated region
      $region41: #{_conv2d_jit.1} parent=39 // pred_check
        %p1184 = pneg %p130
      $region42: #{_conv2d_jit.1} parent=39 // pred_check_branch
        %1186 = sbr.rel (%p1184) target = $region44
      $region43: #{_conv2d_jit.1} parent=39 // pred_region
        %s1187 = smul.u32 64, %s20
        %p1188 = scmp.lt.s32.totalorder %s1187, 4095
        %s1189 = scalar_select %p1188, %s1187, 4095
        %p1190 = scmp.lt.s32.totalorder %s21, 0
        %s1191 = scalar_select %p1190, %s21, 0
        %s1192 = sadd.s32 %s1191, %s1189
        %s1193 = smul.addr %s1192, 8
        %s1194 = scalar_lea.vmem %s3, %s1193
      $region44: #{_conv2d_jit.1} parent=39 // pred_fallthru
        _
    $region40: #{_conv2d_jit.1} parent=5 // pred_fallthru
      _
  $region6: #{_conv2d_jit.1} parent=0 // loop_footer
    %s13 = sadd.s32 1, %s9
  $region7: #{_conv2d_jit.1} parent=0 // loop_footer_branch
    %8 = sbr.rel target = $region3
  $region8: #{_conv2d_jit.1} parent=0 // loop_exit
    _

</llo_original>
